<compile_context>
chip_gen: v7x
topology: tpu7x:2x2x1
jax: 0.10.0
libtpu: 0.0.40
codegen_flags: <defaults>
</compile_context>

<pallas_src>
import jax
import jax.numpy as jnp
from jax.experimental import pallas as pl
from jax.experimental.pallas import tpu as pltpu


def _round_up(x, m):
    return (x + m - 1) // m * m


def classify_kernel(xf_ref, w1_ref, b1_ref, w2_ref, b2_ref, out_ref):
    """One batch-block of the full Classify forward (everything VMEM-resident)."""
    cdt = w1_ref.dtype  # matmul operand dtype (bf16 or f32); accumulation is f32

    # fc1 (projection + prj-bias already folded in) + ReLU.
    # dropout: identity at inference.
    x = xf_ref[...].astype(cdt)                       # in-kernel cast (VPU, hidden)
    h = jnp.dot(x, w1_ref[...],
                preferred_element_type=jnp.float32) + b1_ref[...]   # (bb, Ep) f32
    h = jnp.maximum(h, 0.0)

    # fc2 (temperature already folded into w2/b2).
    logits = jnp.dot(h.astype(cdt), w2_ref[...],
                     preferred_element_type=jnp.float32) + b2_ref[...]  # (bb, Cp)

    # Numerically-stable softmax over the (lane-padded) class axis.  Padded
    # lanes carry a -1e30 bias -> exp == 0, so real-class probabilities are
    # exact.  Exact divide (not approx reciprocal) to match torch softmax.
    m = jnp.max(logits, axis=-1, keepdims=True)
    e = jnp.exp(logits - m)
    out_ref[...] = e / jnp.sum(e, axis=-1, keepdims=True)


def prepare_params(params, len_seq, t1=1.0, use_bf16=True):
    """One-time parameter prep: fold prj into fc1, fold 1/t1 into fc2, lane-pad."""
    wp, bp = params["wp"], params["bp"]        # (D, Dp), (1, Dp)
    w1, b1 = params["w1"], params["b1"]        # (S*Dp, E), (1, E)
    w2, b2 = params["w2"], params["b2"]        # (E, C),    (1, C)
    S = len_seq
    D, Dp = wp.shape
    E = w1.shape[1]
    C = w2.shape[1]

    # Fold the per-position projection into fc1 without materializing the
    # kron(I_S, wp) block-diagonal weight:
    #   flatten(prj(X)) @ w1 + b1 == X_flat @ w1_eff + b1_eff
    #   w1_eff[s*D:(s+1)*D, :] = wp @ w1[s*Dp:(s+1)*Dp, :]
    w1_eff = jnp.einsum("dp,spe->sde", wp,
                        w1.reshape(S, Dp, E)).reshape(S * D, E)     # (S*D, E)
    b1_eff = b1 + jnp.tile(bp, (1, S)) @ w1                         # (1, E)

    # Fold the temperature into fc2 (exact; softmax(logits/t1)).
    inv_t1 = jnp.float32(1.0 / float(t1))
    w2_eff = w2 * inv_t1
    b2_eff = b2 * inv_t1

    # Lane padding (all exact):
    #   E -> Ep (zero cols in w1_eff/b1_eff, zero rows in w2_eff): ReLU(0)*0 = 0
    #   C -> Cp (zero cols in w2_eff, -1e30 padded biases): exp(-1e30 - m) = 0
    Ep = max(128, _round_up(E, 128))
    Cp = max(128, _round_up(C, 128))
    w1_eff = jnp.pad(w1_eff, ((0, 0), (0, Ep - E)))
    b1_eff = jnp.pad(b1_eff, ((0, 0), (0, Ep - E)))
    w2_eff = jnp.pad(w2_eff, ((0, Ep - E), (0, Cp - C)))
    b2_eff = jnp.pad(b2_eff, ((0, 0), (0, Cp - C)))
    pad_lane = (jnp.arange(Cp) >= C)[None, :]
    b2_eff = jnp.where(pad_lane, jnp.float32(-1e30), b2_eff)

    cdt = jnp.bfloat16 if use_bf16 else jnp.float32
    return {
        "w1_eff": w1_eff.astype(cdt),
        "b1_eff": b1_eff.astype(jnp.float32),
        "w2_eff": w2_eff.astype(cdt),
        "b2_eff": b2_eff.astype(jnp.float32),
        "num_class": C,
    }


def classify_forward(x, prep):
    """x: (B, S, D) float32; prep: output of prepare_params. Returns (B, C) f32."""
    B, S, D = x.shape
    w1, b1 = prep["w1_eff"], prep["b1_eff"]
    w2, b2 = prep["w2_eff"], prep["b2_eff"]
    C = prep["num_class"]
    SD, Ep = w1.shape
    Cp = w2.shape[1]
    assert SD == S * D

    # Row-major flatten of (S, D) — pure layout, stays f32 (cast happens in-kernel).
    xf = x.reshape(B, SD)

    # Batch tiling: 8-row granularity, capped at 512 rows/block, and >= 2 grid
    # steps whenever B allows (so v7x's two TensorCores both get work and the
    # pipeline has something to overlap).
    B8 = _round_up(B, 8)
    if B8 >= 16:
        block_b = min(512, _round_up(B8 // 2, 8))
    else:
        block_b = B8
    grid_b = pl.cdiv(B8, block_b)
    Bp = grid_b * block_b
    if Bp != B:
        # Zero rows: softmax of them is finite and row-local; sliced off below.
        xf = jnp.pad(xf, ((0, Bp - B), (0, 0)))

    out = pl.pallas_call(
        classify_kernel,
        out_shape=jax.ShapeDtypeStruct((Bp, Cp), jnp.float32),
        grid=(grid_b,),
        in_specs=[
            pl.BlockSpec((block_b, SD), lambda i: (i, 0)),  # activations (batch-blocked)
            pl.BlockSpec((SD, Ep), lambda i: (0, 0)),       # w1_eff (VMEM-resident)
            pl.BlockSpec((1, Ep), lambda i: (0, 0)),        # b1_eff
            pl.BlockSpec((Ep, Cp), lambda i: (0, 0)),       # w2_eff
            pl.BlockSpec((1, Cp), lambda i: (0, 0)),        # b2_eff
        ],
        out_specs=pl.BlockSpec((block_b, Cp), lambda i: (i, 0)),  # lane-dense output
        compiler_params=pltpu.CompilerParams(
            dimension_semantics=("parallel",)),
    )(xf, w1, b1, w2, b2)

    return out[:B, :C]


def init_params(key, input_dim, embed_dim, len_seq, class_shrink_dim, num_class):
    """Deterministic synthetic parameters (shapes match the PyTorch module)."""
    proj_dim = input_dim // class_shrink_dim
    flat_dim = len_seq * proj_dim
    k = jax.random.split(key, 6)
    # stored as (in, out) so the math is x @ W + b
    return {
        "wp": jax.random.normal(k[0], (input_dim, proj_dim), jnp.float32) * 0.1,
        "bp": jax.random.normal(k[1], (1, proj_dim), jnp.float32) * 0.1,
        "w1": jax.random.normal(k[2], (flat_dim, embed_dim), jnp.float32) * 0.1,
        "b1": jax.random.normal(k[3], (1, embed_dim), jnp.float32) * 0.1,
        "w2": jax.random.normal(k[4], (embed_dim, num_class), jnp.float32) * 0.1,
        "b2": jax.random.normal(k[5], (1, num_class), jnp.float32) * 0.1,
    }


def classify_reference(x, params, t1=1.0):
    """Pure-JAX reference mirroring the PyTorch module (inference mode)."""
    p = jnp.einsum("bsd,de->bse", x, params["wp"]) + params["bp"]
    flat = p.reshape(x.shape[0], -1)
    h = jax.nn.relu(flat @ params["w1"] + params["b1"])
    logits = (h @ params["w2"] + params["b2"]) / t1
    return jax.nn.softmax(logits, axis=1)


if __name__ == "__main__":
    # Small shapes consistent with the module's forward.
    B, S, D = 2, 8, 32            # batch, len_seq, input_dim
    class_shrink_dim = 4          # -> proj_dim = 8
    embed_dim = 32
    num_class = 4

    key = jax.random.PRNGKey(0)
    kx, kp = jax.random.split(key)
    x = jax.random.normal(kx, (B, S, D), jnp.float32)
    params = init_params(kp, D, embed_dim, S, class_shrink_dim, num_class)

    ref = classify_reference(x, params, t1=2.0)

    # f32-operand path (exact semantics); t1 != 1 exercises the folded temperature.
    prep_f32 = prepare_params(params, S, t1=2.0, use_bf16=False)
    out_f32 = jax.block_until_ready(classify_forward(x, prep_f32))
    assert out_f32.shape == (B, num_class)
    assert jnp.allclose(jnp.sum(out_f32, axis=1), 1.0, atol=2e-3)
    assert jnp.allclose(out_f32, ref, atol=2e-3)

    # Default bf16-operand path (v6e/v5e MXU peak, halved weight DMA);
    # accumulation + softmax epilogue stay f32.
    prep_bf16 = prepare_params(params, S, t1=2.0)   # use_bf16=True default
    out_bf16 = jax.block_until_ready(classify_forward(x, prep_bf16))
    assert out_bf16.shape == (B, num_class)
    assert jnp.allclose(jnp.sum(out_bf16, axis=1), 1.0, atol=2e-3)
    assert jnp.allclose(out_bf16, ref, atol=3e-2)

    print("KERNEL_OK")
</pallas_src>

<mosaic_0001>
module attributes {stable_mosaic.version = 11 : i64} {
  func.func @classify_kernel(%arg0: i32, %arg1: memref<8x256xf32, #tpu.memory_space<vmem>>, %arg2: memref<256x128xf32, #tpu.memory_space<vmem>>, %arg3: memref<1x128xf32, #tpu.memory_space<vmem>>, %arg4: memref<128x128xf32, #tpu.memory_space<vmem>>, %arg5: memref<1x128xf32, #tpu.memory_space<vmem>>, %arg6: memref<8x128xf32, #tpu.memory_space<vmem>>) attributes {dimension_semantics = [#tpu.dimension_semantics<parallel>], iteration_bounds = array<i64: 1>, scalar_prefetch = 0 : i64, scratch_operands = 0 : i64, tpu.core_type = #tpu.core_type<tc>, window_params = [{transform_indices = @transform_0, window_bounds = array<i64: 8, 256>}, {pipeline_mode = #tpu.pipeline_mode<synchronous>, transform_indices = @transform_1, window_bounds = array<i64: 256, 128>}, {pipeline_mode = #tpu.pipeline_mode<synchronous>, transform_indices = @transform_2, window_bounds = array<i64: 1, 128>}, {pipeline_mode = #tpu.pipeline_mode<synchronous>, transform_indices = @transform_3, window_bounds = array<i64: 128, 128>}, {pipeline_mode = #tpu.pipeline_mode<synchronous>, transform_indices = @transform_4, window_bounds = array<i64: 1, 128>}, {transform_indices = @transform_5, window_bounds = array<i64: 8, 128>}]} {
    %c0 = arith.constant 0 : index
    %c0_0 = arith.constant 0 : index
    %0 = vector.load %arg1[%c0, %c0_0] : memref<8x256xf32, #tpu.memory_space<vmem>>, vector<8x256xf32>
    %c0_1 = arith.constant 0 : index
    %c0_2 = arith.constant 0 : index
    %1 = vector.load %arg2[%c0_1, %c0_2] : memref<256x128xf32, #tpu.memory_space<vmem>>, vector<256x128xf32>
    %cst = arith.constant dense<0.000000e+00> : vector<8x128xf32>
    %2 = tpu.matmul %0, %1, %cst {dimension_numbers = #tpu.dot_dimension_numbers<[1], [0], [0], [1], [0, 0, 1, 1], [], []>} : vector<8x256xf32>, vector<256x128xf32>, vector<8x128xf32> -> vector<8x128xf32>
    %c0_3 = arith.constant 0 : index
    %c0_4 = arith.constant 0 : index
    %3 = vector.load %arg3[%c0_3, %c0_4] : memref<1x128xf32, #tpu.memory_space<vmem>>, vector<1x128xf32>
    %4 = vector.broadcast %3 : vector<1x128xf32> to vector<8x128xf32>
    %5 = arith.addf %2, %4 : vector<8x128xf32>
    %cst_5 = arith.constant 0.000000e+00 : f32
    %6 = vector.broadcast %cst_5 : f32 to vector<8x128xf32>
    %7 = arith.maximumf %5, %6 : vector<8x128xf32>
    %c0_6 = arith.constant 0 : index
    %c0_7 = arith.constant 0 : index
    %8 = vector.load %arg4[%c0_6, %c0_7] : memref<128x128xf32, #tpu.memory_space<vmem>>, vector<128x128xf32>
    %cst_8 = arith.constant dense<0.000000e+00> : vector<8x128xf32>
    %9 = tpu.matmul %7, %8, %cst_8 {dimension_numbers = #tpu.dot_dimension_numbers<[1], [0], [0], [1], [0, 0, 1, 1], [], []>} : vector<8x128xf32>, vector<128x128xf32>, vector<8x128xf32> -> vector<8x128xf32>
    %c0_9 = arith.constant 0 : index
    %c0_10 = arith.constant 0 : index
    %10 = vector.load %arg5[%c0_9, %c0_10] : memref<1x128xf32, #tpu.memory_space<vmem>>, vector<1x128xf32>
    %11 = vector.broadcast %10 : vector<1x128xf32> to vector<8x128xf32>
    %12 = arith.addf %9, %11 : vector<8x128xf32>
    %cst_11 = arith.constant dense<0xFF800000> : vector<8xf32>
    %13 = vector.multi_reduction <maximumf>, %12, %cst_11 [1] : vector<8x128xf32> to vector<8xf32>
    %14 = vector.shape_cast %13 : vector<8xf32> to vector<8x1xf32>
    %15 = vector.broadcast %14 : vector<8x1xf32> to vector<8x128xf32>
    %16 = arith.subf %12, %15 : vector<8x128xf32>
    %17 = math.exp %16 : vector<8x128xf32>
    %cst_12 = arith.constant dense<0.000000e+00> : vector<8xf32>
    %18 = vector.multi_reduction <add>, %17, %cst_12 [1] : vector<8x128xf32> to vector<8xf32>
    %19 = vector.shape_cast %18 : vector<8xf32> to vector<8x1xf32>
    %20 = vector.broadcast %19 : vector<8x1xf32> to vector<8x128xf32>
    %21 = arith.divf %17, %20 : vector<8x128xf32>
    %c0_13 = arith.constant 0 : index
    %c0_14 = arith.constant 0 : index
    %22 = vector.load %arg6[%c0_13, %c0_14] : memref<8x128xf32, #tpu.memory_space<vmem>>, vector<8x128xf32>
    tpu.vector_store %arg6[%c0_13, %c0_14], %21 {strides = array<i32>} : memref<8x128xf32, #tpu.memory_space<vmem>>, vector<8x128xf32>,
    return
  }
  func.func @transform_0(%arg0: i32) -> (i32, i32) {
    %c0_i32 = arith.constant 0 : i32
    %c0_i32_0 = arith.constant 0 : i32
    return %arg0, %c0_i32 : i32, i32
  }
  func.func @transform_1(%arg0: i32) -> (i32, i32) {
    %c0_i32 = arith.constant 0 : i32
    %c0_i32_0 = arith.constant 0 : i32
    %c0_i32_1 = arith.constant 0 : i32
    return %c0_i32, %c0_i32_0 : i32, i32
  }
  func.func @transform_2(%arg0: i32) -> (i32, i32) {
    %c0_i32 = arith.constant 0 : i32
    %c0_i32_0 = arith.constant 0 : i32
    %c0_i32_1 = arith.constant 0 : i32
    return %c0_i32, %c0_i32_0 : i32, i32
  }
  func.func @transform_3(%arg0: i32) -> (i32, i32) {
    %c0_i32 = arith.constant 0 : i32
    %c0_i32_0 = arith.constant 0 : i32
    %c0_i32_1 = arith.constant 0 : i32
    return %c0_i32, %c0_i32_0 : i32, i32
  }
  func.func @transform_4(%arg0: i32) -> (i32, i32) {
    %c0_i32 = arith.constant 0 : i32
    %c0_i32_0 = arith.constant 0 : i32
    %c0_i32_1 = arith.constant 0 : i32
    return %c0_i32, %c0_i32_0 : i32, i32
  }
  func.func @transform_5(%arg0: i32) -> (i32, i32) {
    %c0_i32 = arith.constant 0 : i32
    %c0_i32_0 = arith.constant 0 : i32
    return %arg0, %c0_i32 : i32, i32
  }
}

</mosaic_0001>

<llo_original>
// kernel: tpu_custom_call.1
$region0: #{tpu_custom_call.1}
  #allocation0 [shape = 'u32[]', space=smem, size = 0x4, offset = 0x4, fixed_abs, tag = 'smem constant byte address 0x4 - core index']
  #allocation1 [shape = 'u32[144,128]{1,0:T(1,128)}', space=vmem, size = 0x12000, scoped, tag = 'internal scratch']
  %s0 = inlined_call_operand.hbm [shape: f32[8,256], index: 0, kind: input, shape index: {}]
  %s1 = inlined_call_operand.hbm [shape: f32[256,128], index: 1, kind: input, shape index: {}]
  %s2 = inlined_call_operand.vmem [shape: f32[1,128], index: 2, kind: input, shape index: {}]
  %s3 = inlined_call_operand.hbm [shape: f32[128,128], index: 3, kind: input, shape index: {}]
  %s4 = inlined_call_operand.vmem [shape: f32[1,128], index: 4, kind: input, shape index: {}]
  %s5 = inlined_call_operand.hbm [shape: f32[8,128], index: 5, kind: output, shape index: {}]
  %s6 = sld [smem:[#allocation0]]
  $region42: #{tpu_custom_call.1} parent=0
    _
  %s8 = ssub.s32 1, %s6
  %s9 = scalar_select 0, %s8, %s6
  $region1: #{tpu_custom_call.1} parent=0
    #allocation2 [shape = 'u8[8192]{0}', space=vmem, size = 0x2000, scoped, tag = 'input window, operand 0, single buffered']
    #allocation3 [shape = 's32[1]{0}', space=sflag, size = 0x4, scoped, tag = 'scoped memory for tpu_custom_call.1']
    #allocation4 [shape = 's32[1]{0}', space=sflag, size = 0x4, scoped, tag = 'scoped memory for tpu_custom_call.1']
    #allocation5 [shape = 'u8[131072]{0}', space=vmem, size = 0x20000, scoped, tag = 'input window, operand 1, single buffered']
    #allocation6 [shape = 's32[1]{0}', space=sflag, size = 0x4, scoped, tag = 'scoped memory for tpu_custom_call.1']
    #allocation7 [shape = 'u8[65536]{0}', space=vmem, size = 0x10000, scoped, tag = 'input window, operand 3, single buffered']
    #allocation8 [shape = 'u8[4096]{0}', space=vmem, size = 0x1000, scoped, tag = 'output window, operand 0, single buffered']
    %10 = vsyncpa [#allocation3], 0
    %11 = vsyncpa [#allocation6], 0
    %12 = vsyncpa [#allocation4], 0
    // Predicated region
    $region2: #{tpu_custom_call.1} parent=1 // pred_check
      _
    $region3: #{tpu_custom_call.1} parent=1 // pred_check_branch
      %14 = sbr.rel (0) target = $region5
    $region4: #{tpu_custom_call.1} parent=1 // pred_region
      %s16 = ssub.s32 256, 256
      %17 = vsyncadd [#allocation3], %s16
      %s19 = sshll.u32 [#allocation2], 4
      %s20 = int_to_ptr.vmem [resolvable:$true] %s19
      %22 = dma.hbm_to_vmem [thread:$0]  %s0, 256, %s20, [#allocation3]
    $region5: #{tpu_custom_call.1} parent=1 // pred_fallthru
      _
    // Predicated region
    $region6: #{tpu_custom_call.1} parent=1 // pred_check
      _
    $region7: #{tpu_custom_call.1} parent=1 // pred_check_branch
      %24 = sbr.rel (0) target = $region9
    $region8: #{tpu_custom_call.1} parent=1 // pred_region
      %s26 = ssub.s32 4096, 4096
      %27 = vsyncadd [#allocation6], %s26
      %s28 = sshll.u32 [#allocation5], 4
      %s29 = int_to_ptr.vmem [resolvable:$true] %s28
      %34 = dma.hbm_to_vmem [thread:$0]  %s1, 4096, %s29, [#allocation6], 128, 128, 8
    $region9: #{tpu_custom_call.1} parent=1 // pred_fallthru
      _
    // Predicated region
    $region10: #{tpu_custom_call.1} parent=1 // pred_check
      _
    $region11: #{tpu_custom_call.1} parent=1 // pred_check_branch
      %36 = sbr.rel (0) target = $region13
    $region12: #{tpu_custom_call.1} parent=1 // pred_region
      _
    $region13: #{tpu_custom_call.1} parent=1 // pred_fallthru
      _
    // Predicated region
    $region14: #{tpu_custom_call.1} parent=1 // pred_check
      _
    $region15: #{tpu_custom_call.1} parent=1 // pred_check_branch
      %38 = sbr.rel (0) target = $region17
    $region16: #{tpu_custom_call.1} parent=1 // pred_region
      %s40 = ssub.s32 2048, 2048
      %41 = vsyncadd [#allocation6], %s40
      %s42 = sshll.u32 [#allocation7], 4
      %s43 = int_to_ptr.vmem [resolvable:$true] %s42
      %48 = dma.hbm_to_vmem [thread:$0]  %s3, 2048, %s43, [#allocation6], 128, 128, 8
    $region17: #{tpu_custom_call.1} parent=1 // pred_fallthru
      _
    // Predicated region
    $region18: #{tpu_custom_call.1} parent=1 // pred_check
      _
    $region19: #{tpu_custom_call.1} parent=1 // pred_check_branch
      %50 = sbr.rel (0) target = $region21
    $region20: #{tpu_custom_call.1} parent=1 // pred_region
      _
    $region21: #{tpu_custom_call.1} parent=1 // pred_fallthru
      _
    // Predicated region
    $region22: #{tpu_custom_call.1} parent=1 // pred_check
      _
    $region23: #{tpu_custom_call.1} parent=1 // pred_check_branch
      %52 = sbr.rel (0) target = $region25
    $region24: #{tpu_custom_call.1} parent=1 // pred_region
      %53 = dma.done [#allocation3], 256
    $region25: #{tpu_custom_call.1} parent=1 // pred_fallthru
      _
    // Predicated region
    $region26: #{tpu_custom_call.1} parent=1 // pred_check
      _
    $region27: #{tpu_custom_call.1} parent=1 // pred_check_branch
      %55 = sbr.rel (0) target = $region29
    $region28: #{tpu_custom_call.1} parent=1 // pred_region
      %56 = dma.done [#allocation6], 4096
    $region29: #{tpu_custom_call.1} parent=1 // pred_fallthru
      _
    // Predicated region
    $region30: #{tpu_custom_call.1} parent=1 // pred_check
      _
    $region31: #{tpu_custom_call.1} parent=1 // pred_check_branch
      %58 = sbr.rel (0) target = $region33
    $region32: #{tpu_custom_call.1} parent=1 // pred_region
      %59 = dma.done [#allocation6], 2048
    $region33: #{tpu_custom_call.1} parent=1 // pred_fallthru
      _
    %v60 = vld [vmem:[#allocation2] sm:$0xff]
    %v61 = vld [vmem:[#allocation2 + $0x8] sm:$0xff]
    %v62 = vld [vmem:[#allocation5] sm:$0xff]
    %v63 = vld [vmem:[#allocation5 + $0x8] sm:$0xff]
    %v64 = vld [vmem:[#allocation5 + $0x10] sm:$0xff]
    %v65 = vld [vmem:[#allocation5 + $0x18] sm:$0xff]
    %v66 = vld [vmem:[#allocation5 + $0x20] sm:$0xff]
    %v67 = vld [vmem:[#allocation5 + $0x28] sm:$0xff]
    %v68 = vld [vmem:[#allocation5 + $0x30] sm:$0xff]
    %v69 = vld [vmem:[#allocation5 + $0x38] sm:$0xff]
    %v70 = vld [vmem:[#allocation5 + $0x40] sm:$0xff]
    %v71 = vld [vmem:[#allocation5 + $0x48] sm:$0xff]
    %v72 = vld [vmem:[#allocation5 + $0x50] sm:$0xff]
    %v73 = vld [vmem:[#allocation5 + $0x58] sm:$0xff]
    %v74 = vld [vmem:[#allocation5 + $0x60] sm:$0xff]
    %v75 = vld [vmem:[#allocation5 + $0x68] sm:$0xff]
    %v76 = vld [vmem:[#allocation5 + $0x70] sm:$0xff]
    %v77 = vld [vmem:[#allocation5 + $0x78] sm:$0xff]
    %v78 = vld [vmem:[#allocation5 + $0x80] sm:$0xff]
    %v79 = vld [vmem:[#allocation5 + $0x88] sm:$0xff]
    %v80 = vld [vmem:[#allocation5 + $0x90] sm:$0xff]
    %v81 = vld [vmem:[#allocation5 + $0x98] sm:$0xff]
    %v82 = vld [vmem:[#allocation5 + $0xa0] sm:$0xff]
    %v83 = vld [vmem:[#allocation5 + $0xa8] sm:$0xff]
    %v84 = vld [vmem:[#allocation5 + $0xb0] sm:$0xff]
    %v85 = vld [vmem:[#allocation5 + $0xb8] sm:$0xff]
    %v86 = vld [vmem:[#allocation5 + $0xc0] sm:$0xff]
    %v87 = vld [vmem:[#allocation5 + $0xc8] sm:$0xff]
    %v88 = vld [vmem:[#allocation5 + $0xd0] sm:$0xff]
    %v89 = vld [vmem:[#allocation5 + $0xd8] sm:$0xff]
    %v90 = vld [vmem:[#allocation5 + $0xe0] sm:$0xff]
    %v91 = vld [vmem:[#allocation5 + $0xe8] sm:$0xff]
    %v92 = vld [vmem:[#allocation5 + $0xf0] sm:$0xff]
    %v93 = vld [vmem:[#allocation5 + $0xf8] sm:$0xff]
    %v94 = vld [vmem:[%s2] sm:$0x1]
    %v96 = vlaneseq
    %v97 = vshrl.u32 %v96, 7
    %v98 = vsub.s32 0, %v97
    %v99 = vrot.slane %v94, %v98
    %101 = vmatprep.subr.mxu0 0.0
    %102 = vmatpush1.msra.mxu0 %v62
    %103 = vmatprep.subr.mxu0 0.0
    %104 = vmatpush1.msra.mxu0 %v63
    %105 = vmatprep.subr.mxu0 0.0
    %106 = vmatpush1.msra.mxu0 %v64
    %107 = vmatprep.subr.mxu0 0.0
    %108 = vmatpush1.msra.mxu0 %v65
    %109 = vmatprep.subr.mxu0 0.0
    %110 = vmatpush1.msra.mxu0 %v66
    %111 = vmatprep.subr.mxu0 0.0
    %112 = vmatpush1.msra.mxu0 %v67
    %113 = vmatprep.subr.mxu0 0.0
    %114 = vmatpush1.msra.mxu0 %v68
    %115 = vmatprep.subr.mxu0 0.0
    %116 = vmatpush1.msra.mxu0 %v69
    %117 = vmatprep.subr.mxu0 0.0
    %118 = vmatpush1.msra.mxu0 %v70
    %119 = vmatprep.subr.mxu0 0.0
    %120 = vmatpush1.msra.mxu0 %v71
    %121 = vmatprep.subr.mxu0 0.0
    %122 = vmatpush1.msra.mxu0 %v72
    %123 = vmatprep.subr.mxu0 0.0
    %124 = vmatpush1.msra.mxu0 %v73
    %125 = vmatprep.subr.mxu0 0.0
    %126 = vmatpush1.msra.mxu0 %v74
    %127 = vmatprep.subr.mxu0 0.0
    %128 = vmatpush1.msra.mxu0 %v75
    %129 = vmatprep.subr.mxu0 0.0
    %130 = vmatpush1.msra.mxu0 %v76
    %131 = vmatprep.subr.mxu0 0.0
    %132 = vmatpush1.msra.mxu0 %v77
    %133 = vmatprep.subr.mxu0 0.0
    %134 = vmatpush1.msra.mxu0 %v78
    %135 = vmatprep.subr.mxu0 0.0
    %136 = vmatpush1.msra.mxu0 %v79
    %137 = vmatprep.subr.mxu0 0.0
    %138 = vmatpush1.msra.mxu0 %v80
    %139 = vmatprep.subr.mxu0 0.0
    %140 = vmatpush1.msra.mxu0 %v81
    %141 = vmatprep.subr.mxu0 0.0
    %142 = vmatpush1.msra.mxu0 %v82
    %143 = vmatprep.subr.mxu0 0.0
    %144 = vmatpush1.msra.mxu0 %v83
    %145 = vmatprep.subr.mxu0 0.0
    %146 = vmatpush1.msra.mxu0 %v84
    %147 = vmatprep.subr.mxu0 0.0
    %148 = vmatpush1.msra.mxu0 %v85
    %149 = vmatprep.subr.mxu0 0.0
    %150 = vmatpush1.msra.mxu0 %v86
    %151 = vmatprep.subr.mxu0 0.0
    %152 = vmatpush1.msra.mxu0 %v87
    %153 = vmatprep.subr.mxu0 0.0
    %154 = vmatpush1.msra.mxu0 %v88
    %155 = vmatprep.subr.mxu0 0.0
    %156 = vmatpush1.msra.mxu0 %v89
    %157 = vmatprep.subr.mxu0 0.0
    %158 = vmatpush1.msra.mxu0 %v90
    %159 = vmatprep.subr.mxu0 0.0
    %160 = vmatpush1.msra.mxu0 %v91
    %161 = vmatprep.subr.mxu0 0.0
    %162 = vmatpush1.msra.mxu0 %v92
    %163 = vmatprep.subr.mxu0 0.0
    %164 = vmatpush1.msra.mxu0 %v93
    %165 = vmatprep.mubr.f32.mxu0 %v61
    %166 = vmatmul.mubr.f32.gmra.mrb[0].mxu0 %v60
    %v167 = vpop.f32.mrb[0].mxu0
    %v168 = vadd.f32 %v99, %v167
    %v169 = vpop.f32.mrb[0].mxu0
    %170 = vdwg.mxu0
    %v171 = vmax.f32 %v168, 0.0
    %v172 = vld [vmem:[#allocation7] sm:$0xff]
    %v173 = vld [vmem:[#allocation7 + $0x8] sm:$0xff]
    %v174 = vld [vmem:[#allocation7 + $0x10] sm:$0xff]
    %v175 = vld [vmem:[#allocation7 + $0x18] sm:$0xff]
    %v176 = vld [vmem:[#allocation7 + $0x20] sm:$0xff]
    %v177 = vld [vmem:[#allocation7 + $0x28] sm:$0xff]
    %v178 = vld [vmem:[#allocation7 + $0x30] sm:$0xff]
    %v179 = vld [vmem:[#allocation7 + $0x38] sm:$0xff]
    %v180 = vld [vmem:[#allocation7 + $0x40] sm:$0xff]
    %v181 = vld [vmem:[#allocation7 + $0x48] sm:$0xff]
    %v182 = vld [vmem:[#allocation7 + $0x50] sm:$0xff]
    %v183 = vld [vmem:[#allocation7 + $0x58] sm:$0xff]
    %v184 = vld [vmem:[#allocation7 + $0x60] sm:$0xff]
    %v185 = vld [vmem:[#allocation7 + $0x68] sm:$0xff]
    %v186 = vld [vmem:[#allocation7 + $0x70] sm:$0xff]
    %v187 = vld [vmem:[#allocation7 + $0x78] sm:$0xff]
    %v188 = vld [vmem:[%s4] sm:$0x1]
    %v190 = vlaneseq
    %v191 = vshrl.u32 %v190, 7
    %v192 = vsub.s32 0, %v191
    %v193 = vrot.slane %v188, %v192
    %195 = vmatprep.subr.mxu0 0.0
    %196 = vmatpush1.msra.mxu0 %v172
    %197 = vmatprep.subr.mxu0 0.0
    %198 = vmatpush1.msra.mxu0 %v173
    %199 = vmatprep.subr.mxu0 0.0
    %200 = vmatpush1.msra.mxu0 %v174
    %201 = vmatprep.subr.mxu0 0.0
    %202 = vmatpush1.msra.mxu0 %v175
    %203 = vmatprep.subr.mxu0 0.0
    %204 = vmatpush1.msra.mxu0 %v176
    %205 = vmatprep.subr.mxu0 0.0
    %206 = vmatpush1.msra.mxu0 %v177
    %207 = vmatprep.subr.mxu0 0.0
    %208 = vmatpush1.msra.mxu0 %v178
    %209 = vmatprep.subr.mxu0 0.0
    %210 = vmatpush1.msra.mxu0 %v179
    %211 = vmatprep.subr.mxu0 0.0
    %212 = vmatpush1.msra.mxu0 %v180
    %213 = vmatprep.subr.mxu0 0.0
    %214 = vmatpush1.msra.mxu0 %v181
    %215 = vmatprep.subr.mxu0 0.0
    %216 = vmatpush1.msra.mxu0 %v182
    %217 = vmatprep.subr.mxu0 0.0
    %218 = vmatpush1.msra.mxu0 %v183
    %219 = vmatprep.subr.mxu0 0.0
    %220 = vmatpush1.msra.mxu0 %v184
    %221 = vmatprep.subr.mxu0 0.0
    %222 = vmatpush1.msra.mxu0 %v185
    %223 = vmatprep.subr.mxu0 0.0
    %224 = vmatpush1.msra.mxu0 %v186
    %225 = vmatprep.subr.mxu0 0.0
    %226 = vmatpush1.msra.mxu0 %v187
    %227 = vmatprep.subr.mxu0 0.0
    %228 = vmatpush1.msra.mxu0 0.0
    %229 = vmatprep.subr.mxu0 0.0
    %230 = vmatpush1.msra.mxu0 0.0
    %231 = vmatprep.subr.mxu0 0.0
    %232 = vmatpush1.msra.mxu0 0.0
    %233 = vmatprep.subr.mxu0 0.0
    %234 = vmatpush1.msra.mxu0 0.0
    %235 = vmatprep.subr.mxu0 0.0
    %236 = vmatpush1.msra.mxu0 0.0
    %237 = vmatprep.subr.mxu0 0.0
    %238 = vmatpush1.msra.mxu0 0.0
    %239 = vmatprep.subr.mxu0 0.0
    %240 = vmatpush1.msra.mxu0 0.0
    %241 = vmatprep.subr.mxu0 0.0
    %242 = vmatpush1.msra.mxu0 0.0
    %243 = vmatprep.subr.mxu0 0.0
    %244 = vmatpush1.msra.mxu0 0.0
    %245 = vmatprep.subr.mxu0 0.0
    %246 = vmatpush1.msra.mxu0 0.0
    %247 = vmatprep.subr.mxu0 0.0
    %248 = vmatpush1.msra.mxu0 0.0
    %249 = vmatprep.subr.mxu0 0.0
    %250 = vmatpush1.msra.mxu0 0.0
    %251 = vmatprep.subr.mxu0 0.0
    %252 = vmatpush1.msra.mxu0 0.0
    %253 = vmatprep.subr.mxu0 0.0
    %254 = vmatpush1.msra.mxu0 0.0
    %255 = vmatprep.subr.mxu0 0.0
    %256 = vmatpush1.msra.mxu0 0.0
    %257 = vmatprep.subr.mxu0 0.0
    %258 = vmatpush1.msra.mxu0 0.0
    %259 = vmatprep.mubr.f32.mxu0 0.0
    %260 = vmatmul.mubr.f32.gmra.mrb[0].mxu0 %v171
    %v261 = vpop.f32.mrb[0].mxu0
    %v262 = vadd.f32 %v193, %v261
    %v263 = vpop.f32.mrb[0].mxu0
    %264 = vdwg.mxu0
    %265 = vmax.xlane.f32.xlu0 %v262
    %v266 = vpop.xlane.xlu0 %265
    %v267 = vsub.f32 %v262, %v266
    %v268 = vmul.f32 %v267, 1.442695
    %v269 = vpow.pop %v268
    %270 = vadd.xlane.f32.xlu0 %v269
    %v271 = vpop.xlane.xlu0 %270
    %v272 = vrcp.pop %v271
    %v273 = vmul.f32 %v269, %v272
    %274 = vst [vmem:[#allocation8] sm:$0xff] %v273
    // Predicated region
    $region34: #{tpu_custom_call.1} parent=1 // pred_check
      _
    $region35: #{tpu_custom_call.1} parent=1 // pred_check_branch
      %276 = sbr.rel (0) target = $region37
    $region36: #{tpu_custom_call.1} parent=1 // pred_region
      %s278 = ssub.s32 128, 128
      %279 = vsyncadd [#allocation4], %s278
      %s281 = sshll.u32 [#allocation8], 4
      %s282 = int_to_ptr.vmem [resolvable:$true] %s281
      %284 = dma.vmem_to_hbm [thread:$0]  %s282, 128, %s5, [#allocation4]
    $region37: #{tpu_custom_call.1} parent=1 // pred_fallthru
      _
    // Predicated region
    $region38: #{tpu_custom_call.1} parent=1 // pred_check
      _
    $region39: #{tpu_custom_call.1} parent=1 // pred_check_branch
      %286 = sbr.rel (0) target = $region41
    $region40: #{tpu_custom_call.1} parent=1 // pred_region
      %287 = dma.done [#allocation4], 128
    $region41: #{tpu_custom_call.1} parent=1 // pred_fallthru
      _
    %288 = vsyncpa [#allocation3], 1
    %289 = vsyncpa [#allocation6], 1
    %290 = vsyncpa [#allocation4], 1

</llo_original>
